<compile_context>
chip_gen: v7x
topology: tpu7x:2x2x1
jax: 0.10.0
libtpu: 0.0.40
codegen_flags: <defaults>
</compile_context>

<pallas_src>
import functools

import numpy as np
import jax
import jax.numpy as jnp
from jax.experimental import pallas as pl
from jax.experimental.pallas import tpu as pltpu


def _conv3x3_kernel(x_ref, w_ref, m_ref, o_ref, *, W, HW, N):
    """Single grid step: whole (tiny) problem at once.

    x_ref: (Cin_pad, N*HW)    channels 0..Cin-1, ones row at Cin, zeros after
    w_ref: (Cout, 9*Cin_pad)  tap-major weights; center-tap ones column = bias
    m_ref: (9, N*HW)          per-tap halo masks (1.0 in-image, 0.0 outside)
    o_ref: (N, Cout, HW)      flattened NCHW output
    """
    x = x_ref[...]                                   # (Cin_pad, L)
    L = x.shape[1]

    # Build the (9*Cin_pad, L) im2col patch with XLU lane rolls + const masks.
    taps = []
    t = 0
    for dh in (-1, 0, 1):
        for dw in (-1, 0, 1):
            off = dh * W + dw
            tap = x if off == 0 else pltpu.roll(x, (-off) % L, 1)
            if off != 0:                             # center tap needs no mask
                tap = tap * m_ref[t:t + 1, :]        # (1, L) sublane-broadcast
            taps.append(tap)
            t += 1
    patch = jnp.concatenate(taps, axis=0)            # sublane-aligned concat

    # One MXU contraction; bias rides in via the ones row / bias column.
    acc = jnp.dot(w_ref[...], patch, preferred_element_type=jnp.float32)

    # Per-image stores: lane offsets are multiples of 128 (HW % 128 == 0),
    # 256-lane wide -> unmasked vst, output is already NCHW-flat.
    for n in range(N):
        o_ref[n] = acc[:, n * HW:(n + 1) * HW].astype(o_ref.dtype)


def key_generator_forward(x_nchw, w_oihw, bias):
    """Pallas implementation of KeyGenerator.forward (nn.Conv2d 3x3, pad 1)."""
    N, Cin, H, W = x_nchw.shape
    Cout = w_oihw.shape[0]
    HW = H * W
    L = N * HW
    dtype = x_nchw.dtype

    if HW % 128 != 0:
        # TODO(synk): explicit-pad fallback for spatial sizes whose H*W is not
        # a multiple of 128 lanes (rolls would wrap through lane padding).
        raise NotImplementedError("H*W must be a multiple of 128")

    # Room for Cin channels + one constant ones row (bias), 8-sublane aligned.
    cin_pad = ((Cin + 1 + 7) // 8) * 8

    # ---- layout glue (tiny, fused by XLA) ----------------------------------
    # (N, Cin, H, W) -> (Cin, N*H*W); lane l = n*HW + h*W + w.
    x_flat = jnp.transpose(x_nchw, (1, 0, 2, 3)).reshape(Cin, L)
    pieces = [x_flat, jnp.ones((1, L), dtype)]
    if cin_pad - Cin - 1 > 0:
        pieces.append(jnp.zeros((cin_pad - Cin - 1, L), dtype))
    x_pad = jnp.concatenate(pieces, axis=0)                      # (cin_pad, L)

    # OIHW -> (Cout, tap, Cin), zero-pad channel dim to cin_pad, and place the
    # bias in the center-tap column that lines up with the ones row of x_pad.
    w_tap = jnp.transpose(w_oihw, (0, 2, 3, 1)).reshape(Cout, 9, Cin)
    w_full = jnp.zeros((Cout, 9, cin_pad), dtype)
    w_full = w_full.at[:, :, :Cin].set(w_tap.astype(dtype))
    w_full = w_full.at[:, 4, Cin].set(bias.astype(dtype))        # center tap
    w_flat = w_full.reshape(Cout, 9 * cin_pad)

    # Compile-time halo masks (trace-time numpy constants), one row per tap.
    lanes = np.arange(L)
    pix = lanes % HW
    hh = pix // W
    ww = pix % W
    masks_np = np.ones((9, L), np.float32)
    t = 0
    for dh in (-1, 0, 1):
        for dw in (-1, 0, 1):
            valid = ((hh + dh >= 0) & (hh + dh < H) &
                     (ww + dw >= 0) & (ww + dw < W))
            masks_np[t] = valid.astype(np.float32)
            t += 1
    masks = jnp.asarray(masks_np, dtype)

    kernel = functools.partial(_conv3x3_kernel, W=W, HW=HW, N=N)

    out_flat = pl.pallas_call(
        kernel,
        out_shape=jax.ShapeDtypeStruct((N, Cout, HW), dtype),
        grid=(1,),
        in_specs=[
            pl.BlockSpec((cin_pad, L), lambda i: (0, 0)),
            pl.BlockSpec((Cout, 9 * cin_pad), lambda i: (0, 0)),
            pl.BlockSpec((9, L), lambda i: (0, 0)),
        ],
        out_specs=pl.BlockSpec((N, Cout, HW), lambda i: (0, 0, 0)),
        compiler_params=pltpu.CompilerParams(
            dimension_semantics=("arbitrary",)),
    )(x_pad, w_flat, masks)

    # Output is already NCHW-flat: reshape only, no transpose.
    return out_flat.reshape(N, Cout, H, W)


if __name__ == "__main__":
    # Shapes implied by the module: batch=2, indim=4, keydim=8, 16x16 spatial.
    N, Cin, Cout, H, W = 2, 4, 8, 16, 16

    key = jax.random.PRNGKey(0)
    kx, kw, kb = jax.random.split(key, 3)

    x = jax.random.normal(kx, (N, Cin, H, W), dtype=jnp.float32)
    w = jax.random.normal(kw, (Cout, Cin, 3, 3), dtype=jnp.float32) * 0.1
    b = jax.random.normal(kb, (Cout,), dtype=jnp.float32) * 0.1

    out = jax.block_until_ready(jax.jit(key_generator_forward)(x, w, b))

    # Reference check against XLA's conv (exact f32 reference).
    ref = jax.lax.conv_general_dilated(
        x, w, window_strides=(1, 1), padding=((1, 1), (1, 1)),
        dimension_numbers=("NCHW", "OIHW", "NCHW"),
        precision=jax.lax.Precision.HIGHEST,
    ) + b.reshape(1, Cout, 1, 1)

    assert out.shape == (N, Cout, H, W)
    assert jnp.allclose(out, ref, atol=1e-4, rtol=1e-4)
    print("KERNEL_OK")
</pallas_src>

<mosaic_0001>
module attributes {stable_mosaic.version = 11 : i64} {
  func.func @_conv3x3_kernel(%arg0: i32, %arg1: memref<8x512xf32, #tpu.memory_space<vmem>>, %arg2: memref<8x72xf32, #tpu.memory_space<vmem>>, %arg3: memref<9x512xf32, #tpu.memory_space<vmem>>, %arg4: memref<2x8x256xf32, #tpu.memory_space<vmem>>) attributes {dimension_semantics = [#tpu.dimension_semantics<arbitrary>], iteration_bounds = array<i64: 1>, scalar_prefetch = 0 : i64, scratch_operands = 0 : i64, tpu.core_type = #tpu.core_type<tc>, window_params = [{pipeline_mode = #tpu.pipeline_mode<synchronous>, transform_indices = @transform_0, window_bounds = array<i64: 8, 512>}, {pipeline_mode = #tpu.pipeline_mode<synchronous>, transform_indices = @transform_1, window_bounds = array<i64: 8, 72>}, {pipeline_mode = #tpu.pipeline_mode<synchronous>, transform_indices = @transform_2, window_bounds = array<i64: 9, 512>}, {pipeline_mode = #tpu.pipeline_mode<synchronous>, transform_indices = @transform_3, window_bounds = array<i64: 2, 8, 256>}]} {
    %c0 = arith.constant 0 : index
    %c0_0 = arith.constant 0 : index
    %0 = vector.load %arg1[%c0, %c0_0] : memref<8x512xf32, #tpu.memory_space<vmem>>, vector<8x512xf32>
    %c17_i32 = arith.constant 17 : i32
    %1 = tpu.dynamic_rotate %0 by %c17_i32 dim 1 : vector<8x512xf32>, i32 -> vector<8x512xf32>
    %c0_1 = arith.constant 0 : index
    %c0_2 = arith.constant 0 : index
    %2 = vector.load %arg3[%c0_1, %c0_2] : memref<9x512xf32, #tpu.memory_space<vmem>>, vector<1x512xf32>
    %3 = vector.broadcast %2 : vector<1x512xf32> to vector<8x512xf32>
    %4 = arith.mulf %1, %3 : vector<8x512xf32>
    %c16_i32 = arith.constant 16 : i32
    %5 = tpu.dynamic_rotate %0 by %c16_i32 dim 1 : vector<8x512xf32>, i32 -> vector<8x512xf32>
    %c1 = arith.constant 1 : index
    %c0_3 = arith.constant 0 : index
    %6 = vector.load %arg3[%c1, %c0_3] : memref<9x512xf32, #tpu.memory_space<vmem>>, vector<1x512xf32>
    %7 = vector.broadcast %6 : vector<1x512xf32> to vector<8x512xf32>
    %8 = arith.mulf %5, %7 : vector<8x512xf32>
    %c15_i32 = arith.constant 15 : i32
    %9 = tpu.dynamic_rotate %0 by %c15_i32 dim 1 : vector<8x512xf32>, i32 -> vector<8x512xf32>
    %c2 = arith.constant 2 : index
    %c0_4 = arith.constant 0 : index
    %10 = vector.load %arg3[%c2, %c0_4] : memref<9x512xf32, #tpu.memory_space<vmem>>, vector<1x512xf32>
    %11 = vector.broadcast %10 : vector<1x512xf32> to vector<8x512xf32>
    %12 = arith.mulf %9, %11 : vector<8x512xf32>
    %c1_i32 = arith.constant 1 : i32
    %13 = tpu.dynamic_rotate %0 by %c1_i32 dim 1 : vector<8x512xf32>, i32 -> vector<8x512xf32>
    %c3 = arith.constant 3 : index
    %c0_5 = arith.constant 0 : index
    %14 = vector.load %arg3[%c3, %c0_5] : memref<9x512xf32, #tpu.memory_space<vmem>>, vector<1x512xf32>
    %15 = vector.broadcast %14 : vector<1x512xf32> to vector<8x512xf32>
    %16 = arith.mulf %13, %15 : vector<8x512xf32>
    %c511_i32 = arith.constant 511 : i32
    %17 = tpu.dynamic_rotate %0 by %c511_i32 dim 1 : vector<8x512xf32>, i32 -> vector<8x512xf32>
    %c5 = arith.constant 5 : index
    %c0_6 = arith.constant 0 : index
    %18 = vector.load %arg3[%c5, %c0_6] : memref<9x512xf32, #tpu.memory_space<vmem>>, vector<1x512xf32>
    %19 = vector.broadcast %18 : vector<1x512xf32> to vector<8x512xf32>
    %20 = arith.mulf %17, %19 : vector<8x512xf32>
    %c497_i32 = arith.constant 497 : i32
    %21 = tpu.dynamic_rotate %0 by %c497_i32 dim 1 : vector<8x512xf32>, i32 -> vector<8x512xf32>
    %c6 = arith.constant 6 : index
    %c0_7 = arith.constant 0 : index
    %22 = vector.load %arg3[%c6, %c0_7] : memref<9x512xf32, #tpu.memory_space<vmem>>, vector<1x512xf32>
    %23 = vector.broadcast %22 : vector<1x512xf32> to vector<8x512xf32>
    %24 = arith.mulf %21, %23 : vector<8x512xf32>
    %c496_i32 = arith.constant 496 : i32
    %25 = tpu.dynamic_rotate %0 by %c496_i32 dim 1 : vector<8x512xf32>, i32 -> vector<8x512xf32>
    %c7 = arith.constant 7 : index
    %c0_8 = arith.constant 0 : index
    %26 = vector.load %arg3[%c7, %c0_8] : memref<9x512xf32, #tpu.memory_space<vmem>>, vector<1x512xf32>
    %27 = vector.broadcast %26 : vector<1x512xf32> to vector<8x512xf32>
    %28 = arith.mulf %25, %27 : vector<8x512xf32>
    %c495_i32 = arith.constant 495 : i32
    %29 = tpu.dynamic_rotate %0 by %c495_i32 dim 1 : vector<8x512xf32>, i32 -> vector<8x512xf32>
    %c8 = arith.constant 8 : index
    %c0_9 = arith.constant 0 : index
    %30 = vector.load %arg3[%c8, %c0_9] : memref<9x512xf32, #tpu.memory_space<vmem>>, vector<1x512xf32>
    %31 = vector.broadcast %30 : vector<1x512xf32> to vector<8x512xf32>
    %32 = arith.mulf %29, %31 : vector<8x512xf32>
    %33 = tpu.concatenate %4, %8, %12, %16, %0, %20, %24, %28, %32 in 0 : vector<8x512xf32>, vector<8x512xf32>, vector<8x512xf32>, vector<8x512xf32>, vector<8x512xf32>, vector<8x512xf32>, vector<8x512xf32>, vector<8x512xf32>, vector<8x512xf32> -> vector<72x512xf32>
    %c0_10 = arith.constant 0 : index
    %c0_11 = arith.constant 0 : index
    %34 = vector.load %arg2[%c0_10, %c0_11] : memref<8x72xf32, #tpu.memory_space<vmem>>, vector<8x72xf32>
    %cst = arith.constant dense<0.000000e+00> : vector<8x512xf32>
    %35 = tpu.matmul %34, %33, %cst {dimension_numbers = #tpu.dot_dimension_numbers<[1], [0], [0], [1], [0, 0, 1, 1], [], []>} : vector<8x72xf32>, vector<72x512xf32>, vector<8x512xf32> -> vector<8x512xf32>
    %36 = vector.extract_strided_slice %35 {offsets = [0, 0], sizes = [8, 256], strides = [1, 1]} : vector<8x512xf32> to vector<8x256xf32>
    %c0_12 = arith.constant 0 : index
    %c0_13 = arith.constant 0 : index
    %c0_14 = arith.constant 0 : index
    %37 = vector.load %arg4[%c0_12, %c0_13, %c0_14] : memref<2x8x256xf32, #tpu.memory_space<vmem>>, vector<1x8x256xf32>
    %38 = vector.shape_cast %37 : vector<1x8x256xf32> to vector<8x256xf32>
    %39 = vector.shape_cast %36 : vector<8x256xf32> to vector<1x8x256xf32>
    tpu.vector_store %arg4[%c0_12, %c0_13, %c0_14], %39 {strides = array<i32>} : memref<2x8x256xf32, #tpu.memory_space<vmem>>, vector<1x8x256xf32>,
    %40 = vector.extract_strided_slice %35 {offsets = [0, 256], sizes = [8, 256], strides = [1, 1]} : vector<8x512xf32> to vector<8x256xf32>
    %c1_15 = arith.constant 1 : index
    %c0_16 = arith.constant 0 : index
    %c0_17 = arith.constant 0 : index
    %41 = vector.load %arg4[%c1_15, %c0_16, %c0_17] : memref<2x8x256xf32, #tpu.memory_space<vmem>>, vector<1x8x256xf32>
    %42 = vector.shape_cast %41 : vector<1x8x256xf32> to vector<8x256xf32>
    %43 = vector.shape_cast %40 : vector<8x256xf32> to vector<1x8x256xf32>
    tpu.vector_store %arg4[%c1_15, %c0_16, %c0_17], %43 {strides = array<i32>} : memref<2x8x256xf32, #tpu.memory_space<vmem>>, vector<1x8x256xf32>,
    return
  }
  func.func @transform_0(%arg0: i32) -> (i32, i32) {
    %c0_i32 = arith.constant 0 : i32
    %c0_i32_0 = arith.constant 0 : i32
    %c0_i32_1 = arith.constant 0 : i32
    return %c0_i32, %c0_i32_0 : i32, i32
  }
  func.func @transform_1(%arg0: i32) -> (i32, i32) {
    %c0_i32 = arith.constant 0 : i32
    %c0_i32_0 = arith.constant 0 : i32
    %c0_i32_1 = arith.constant 0 : i32
    return %c0_i32, %c0_i32_0 : i32, i32
  }
  func.func @transform_2(%arg0: i32) -> (i32, i32) {
    %c0_i32 = arith.constant 0 : i32
    %c0_i32_0 = arith.constant 0 : i32
    %c0_i32_1 = arith.constant 0 : i32
    return %c0_i32, %c0_i32_0 : i32, i32
  }
  func.func @transform_3(%arg0: i32) -> (i32, i32, i32) {
    %c0_i32 = arith.constant 0 : i32
    %c0_i32_0 = arith.constant 0 : i32
    %c0_i32_1 = arith.constant 0 : i32
    %c0_i32_2 = arith.constant 0 : i32
    return %c0_i32, %c0_i32_0, %c0_i32_1 : i32, i32, i32
  }
}

</mosaic_0001>

<llo_original>
// kernel: key_generator_forward.1
$region0: #{key_generator_forward.1}
  #allocation0 [shape = 'u32[]', space=smem, size = 0x4, offset = 0x4, fixed_abs, tag = 'smem constant byte address 0x4 - core index']
  #allocation1 [shape = 'u32[144,128]{1,0:T(1,128)}', space=vmem, size = 0x12000, scoped, tag = 'internal scratch']
  %s0 = inlined_call_operand.vmem [shape: f32[8,512], index: 0, kind: input, shape index: {}]
  %s1 = inlined_call_operand.vmem [shape: f32[8,72], index: 1, kind: input, shape index: {}]
  %s2 = inlined_call_operand.vmem [shape: f32[9,512], index: 2, kind: input, shape index: {}]
  %s3 = inlined_call_operand.vmem [shape: f32[2,8,256], index: 3, kind: output, shape index: {}]
  %s4 = sld [smem:[#allocation0]]
  $region22: #{key_generator_forward.1} parent=0
    _
  %s6 = ssub.s32 1, %s4
  %s7 = scalar_select 0, %s6, %s4
  // Predicated region
  $region2: #{key_generator_forward.1} parent=0 // pred_check
    _
  $region3: #{key_generator_forward.1} parent=0 // pred_check_branch
    %9 = sbr.rel (0) target = $region5
  $region4: #{key_generator_forward.1} parent=0 // pred_region
    _
  $region5: #{key_generator_forward.1} parent=0 // pred_fallthru
    _
  // Predicated region
  $region6: #{key_generator_forward.1} parent=0 // pred_check
    _
  $region7: #{key_generator_forward.1} parent=0 // pred_check_branch
    %11 = sbr.rel (0) target = $region9
  $region8: #{key_generator_forward.1} parent=0 // pred_region
    _
  $region9: #{key_generator_forward.1} parent=0 // pred_fallthru
    _
  // Predicated region
  $region10: #{key_generator_forward.1} parent=0 // pred_check
    _
  $region11: #{key_generator_forward.1} parent=0 // pred_check_branch
    %13 = sbr.rel (0) target = $region13
  $region12: #{key_generator_forward.1} parent=0 // pred_region
    _
  $region13: #{key_generator_forward.1} parent=0 // pred_fallthru
    _
  %v14 = vld [vmem:[%s0] sm:$0xff]
  %v15 = vld [vmem:[%s0 + $0x8] sm:$0xff]
  %v16 = vld [vmem:[%s0 + $0x10] sm:$0xff]
  %v17 = vld [vmem:[%s0 + $0x18] sm:$0xff]
  %18 = vrot.lane.b32.xlu0 %v14, 17
  %v19 = vpop.permute.xlu0 %18
  %20 = vrot.lane.b32.xlu0 %v15, 17
  %v21 = vpop.permute.xlu0 %20
  %22 = vrot.lane.b32.xlu0 %v16, 17
  %v23 = vpop.permute.xlu0 %22
  %24 = vrot.lane.b32.xlu0 %v17, 17
  %v25 = vpop.permute.xlu0 %24
  %v26 = vlaneseq
  %v27 = vand.u32 %v26, 127
  %vm28 = vcmp.lt.s32.totalorder %v27, 17
  %v29 = vsel %vm28, %v23, %v25
  %v30 = vsel %vm28, %v21, %v23
  %v31 = vsel %vm28, %v19, %v21
  %v32 = vsel %vm28, %v25, %v19
  %v33 = vld [vmem:[%s2] ss:$8 sm:$0xf]
  %v35 = vlaneseq
  %v36 = vshrl.u32 %v35, 7
  %v37 = vsub.s32 0, %v36
  %v38 = vrot.slane %v33, %v37
  %v39 = vlaneseq
  %v40 = vshrl.u32 %v39, 7
  %v41 = vsub.s32 1, %v40
  %v42 = vrot.slane %v33, %v41
  %v43 = vlaneseq
  %v44 = vshrl.u32 %v43, 7
  %v45 = vsub.s32 2, %v44
  %v46 = vrot.slane %v33, %v45
  %v47 = vlaneseq
  %v48 = vshrl.u32 %v47, 7
  %v49 = vsub.s32 3, %v48
  %v50 = vrot.slane %v33, %v49
  %v55 = vmul.f32 %v32, %v38
  %v56 = vmul.f32 %v31, %v42
  %v57 = vmul.f32 %v30, %v46
  %v58 = vmul.f32 %v29, %v50
  %59 = vrot.lane.b32.xlu0 %v14, 16
  %v60 = vpop.permute.xlu0 %59
  %61 = vrot.lane.b32.xlu0 %v15, 16
  %v62 = vpop.permute.xlu0 %61
  %63 = vrot.lane.b32.xlu0 %v16, 16
  %v64 = vpop.permute.xlu0 %63
  %65 = vrot.lane.b32.xlu0 %v17, 16
  %v66 = vpop.permute.xlu0 %65
  %vm67 = vcmp.lt.s32.totalorder %v27, 16
  %v68 = vsel %vm67, %v64, %v66
  %v69 = vsel %vm67, %v62, %v64
  %v70 = vsel %vm67, %v60, %v62
  %v71 = vsel %vm67, %v66, %v60
  %s72 = scalar_lea.vmem %s2, 1
  %v73 = vld [vmem:[%s72] ss:$8 sm:$0xf]
  %v75 = vlaneseq
  %v76 = vshrl.u32 %v75, 7
  %v77 = vsub.s32 0, %v76
  %v78 = vrot.slane %v73, %v77
  %v79 = vlaneseq
  %v80 = vshrl.u32 %v79, 7
  %v81 = vsub.s32 1, %v80
  %v82 = vrot.slane %v73, %v81
  %v83 = vlaneseq
  %v84 = vshrl.u32 %v83, 7
  %v85 = vsub.s32 2, %v84
  %v86 = vrot.slane %v73, %v85
  %v87 = vlaneseq
  %v88 = vshrl.u32 %v87, 7
  %v89 = vsub.s32 3, %v88
  %v90 = vrot.slane %v73, %v89
  %v95 = vmul.f32 %v71, %v78
  %v96 = vmul.f32 %v70, %v82
  %v97 = vmul.f32 %v69, %v86
  %v98 = vmul.f32 %v68, %v90
  %99 = vrot.lane.b32.xlu0 %v14, 15
  %v100 = vpop.permute.xlu0 %99
  %101 = vrot.lane.b32.xlu0 %v15, 15
  %v102 = vpop.permute.xlu0 %101
  %103 = vrot.lane.b32.xlu0 %v16, 15
  %v104 = vpop.permute.xlu0 %103
  %105 = vrot.lane.b32.xlu0 %v17, 15
  %v106 = vpop.permute.xlu0 %105
  %vm107 = vcmp.lt.s32.totalorder %v27, 15
  %v108 = vsel %vm107, %v104, %v106
  %v109 = vsel %vm107, %v102, %v104
  %v110 = vsel %vm107, %v100, %v102
  %v111 = vsel %vm107, %v106, %v100
  %s112 = scalar_lea.vmem %s2, 2
  %v113 = vld [vmem:[%s112] ss:$8 sm:$0xf]
  %v115 = vlaneseq
  %v116 = vshrl.u32 %v115, 7
  %v117 = vsub.s32 0, %v116
  %v118 = vrot.slane %v113, %v117
  %v119 = vlaneseq
  %v120 = vshrl.u32 %v119, 7
  %v121 = vsub.s32 1, %v120
  %v122 = vrot.slane %v113, %v121
  %v123 = vlaneseq
  %v124 = vshrl.u32 %v123, 7
  %v125 = vsub.s32 2, %v124
  %v126 = vrot.slane %v113, %v125
  %v127 = vlaneseq
  %v128 = vshrl.u32 %v127, 7
  %v129 = vsub.s32 3, %v128
  %v130 = vrot.slane %v113, %v129
  %v135 = vmul.f32 %v111, %v118
  %v136 = vmul.f32 %v110, %v122
  %v137 = vmul.f32 %v109, %v126
  %v138 = vmul.f32 %v108, %v130
  %139 = vrot.lane.b32.xlu0 %v14, 1
  %v140 = vpop.permute.xlu0 %139
  %141 = vrot.lane.b32.xlu0 %v15, 1
  %v142 = vpop.permute.xlu0 %141
  %143 = vrot.lane.b32.xlu0 %v16, 1
  %v144 = vpop.permute.xlu0 %143
  %145 = vrot.lane.b32.xlu0 %v17, 1
  %v146 = vpop.permute.xlu0 %145
  %vm147 = vcmp.lt.s32.totalorder %v27, 1
  %v148 = vsel %vm147, %v144, %v146
  %v149 = vsel %vm147, %v142, %v144
  %v150 = vsel %vm147, %v140, %v142
  %v151 = vsel %vm147, %v146, %v140
  %s152 = scalar_lea.vmem %s2, 3
  %v153 = vld [vmem:[%s152] ss:$8 sm:$0xf]
  %v155 = vlaneseq
  %v156 = vshrl.u32 %v155, 7
  %v157 = vsub.s32 0, %v156
  %v158 = vrot.slane %v153, %v157
  %v159 = vlaneseq
  %v160 = vshrl.u32 %v159, 7
  %v161 = vsub.s32 1, %v160
  %v162 = vrot.slane %v153, %v161
  %v163 = vlaneseq
  %v164 = vshrl.u32 %v163, 7
  %v165 = vsub.s32 2, %v164
  %v166 = vrot.slane %v153, %v165
  %v167 = vlaneseq
  %v168 = vshrl.u32 %v167, 7
  %v169 = vsub.s32 3, %v168
  %v170 = vrot.slane %v153, %v169
  %v175 = vmul.f32 %v151, %v158
  %v176 = vmul.f32 %v150, %v162
  %v177 = vmul.f32 %v149, %v166
  %v178 = vmul.f32 %v148, %v170
  %179 = vrot.lane.b32.xlu0 %v14, 127
  %v180 = vpop.permute.xlu0 %179
  %181 = vrot.lane.b32.xlu0 %v15, 127
  %v182 = vpop.permute.xlu0 %181
  %183 = vrot.lane.b32.xlu0 %v16, 127
  %v184 = vpop.permute.xlu0 %183
  %185 = vrot.lane.b32.xlu0 %v17, 127
  %v186 = vpop.permute.xlu0 %185
  %vm187 = vcmp.lt.s32.totalorder %v27, 127
  %v188 = vsel %vm187, %v184, %v186
  %v189 = vsel %vm187, %v182, %v184
  %v190 = vsel %vm187, %v180, %v182
  %v191 = vsel %vm187, %v186, %v180
  %s192 = scalar_lea.vmem %s2, 5
  %v193 = vld [vmem:[%s192] ss:$8 sm:$0xf]
  %v195 = vlaneseq
  %v196 = vshrl.u32 %v195, 7
  %v197 = vsub.s32 0, %v196
  %v198 = vrot.slane %v193, %v197
  %v199 = vlaneseq
  %v200 = vshrl.u32 %v199, 7
  %v201 = vsub.s32 1, %v200
  %v202 = vrot.slane %v193, %v201
  %v203 = vlaneseq
  %v204 = vshrl.u32 %v203, 7
  %v205 = vsub.s32 2, %v204
  %v206 = vrot.slane %v193, %v205
  %v207 = vlaneseq
  %v208 = vshrl.u32 %v207, 7
  %v209 = vsub.s32 3, %v208
  %v210 = vrot.slane %v193, %v209
  %v215 = vmul.f32 %v190, %v198
  %v216 = vmul.f32 %v189, %v202
  %v217 = vmul.f32 %v188, %v206
  %v218 = vmul.f32 %v191, %v210
  %219 = vrot.lane.b32.xlu0 %v14, 113
  %v220 = vpop.permute.xlu0 %219
  %221 = vrot.lane.b32.xlu0 %v15, 113
  %v222 = vpop.permute.xlu0 %221
  %223 = vrot.lane.b32.xlu0 %v16, 113
  %v224 = vpop.permute.xlu0 %223
  %225 = vrot.lane.b32.xlu0 %v17, 113
  %v226 = vpop.permute.xlu0 %225
  %vm227 = vcmp.lt.s32.totalorder %v27, 113
  %v228 = vsel %vm227, %v224, %v226
  %v229 = vsel %vm227, %v222, %v224
  %v230 = vsel %vm227, %v220, %v222
  %v231 = vsel %vm227, %v226, %v220
  %s232 = scalar_lea.vmem %s2, 6
  %v233 = vld [vmem:[%s232] ss:$8 sm:$0xf]
  %v235 = vlaneseq
  %v236 = vshrl.u32 %v235, 7
  %v237 = vsub.s32 0, %v236
  %v238 = vrot.slane %v233, %v237
  %v239 = vlaneseq
  %v240 = vshrl.u32 %v239, 7
  %v241 = vsub.s32 1, %v240
  %v242 = vrot.slane %v233, %v241
  %v243 = vlaneseq
  %v244 = vshrl.u32 %v243, 7
  %v245 = vsub.s32 2, %v244
  %v246 = vrot.slane %v233, %v245
  %v247 = vlaneseq
  %v248 = vshrl.u32 %v247, 7
  %v249 = vsub.s32 3, %v248
  %v250 = vrot.slane %v233, %v249
  %v255 = vmul.f32 %v230, %v238
  %v256 = vmul.f32 %v229, %v242
  %v257 = vmul.f32 %v228, %v246
  %v258 = vmul.f32 %v231, %v250
  %259 = vrot.lane.b32.xlu0 %v14, 112
  %v260 = vpop.permute.xlu0 %259
  %261 = vrot.lane.b32.xlu0 %v15, 112
  %v262 = vpop.permute.xlu0 %261
  %263 = vrot.lane.b32.xlu0 %v16, 112
  %v264 = vpop.permute.xlu0 %263
  %265 = vrot.lane.b32.xlu0 %v17, 112
  %v266 = vpop.permute.xlu0 %265
  %vm267 = vcmp.lt.s32.totalorder %v27, 112
  %v268 = vsel %vm267, %v264, %v266
  %v269 = vsel %vm267, %v262, %v264
  %v270 = vsel %vm267, %v260, %v262
  %v271 = vsel %vm267, %v266, %v260
  %s272 = scalar_lea.vmem %s2, 7
  %v273 = vld [vmem:[%s272] ss:$8 sm:$0xf]
  %v275 = vlaneseq
  %v276 = vshrl.u32 %v275, 7
  %v277 = vsub.s32 0, %v276
  %v278 = vrot.slane %v273, %v277
  %v279 = vlaneseq
  %v280 = vshrl.u32 %v279, 7
  %v281 = vsub.s32 1, %v280
  %v282 = vrot.slane %v273, %v281
  %v283 = vlaneseq
  %v284 = vshrl.u32 %v283, 7
  %v285 = vsub.s32 2, %v284
  %v286 = vrot.slane %v273, %v285
  %v287 = vlaneseq
  %v288 = vshrl.u32 %v287, 7
  %v289 = vsub.s32 3, %v288
  %v290 = vrot.slane %v273, %v289
  %v295 = vmul.f32 %v270, %v278
  %v296 = vmul.f32 %v269, %v282
  %v297 = vmul.f32 %v268, %v286
  %v298 = vmul.f32 %v271, %v290
  %299 = vrot.lane.b32.xlu0 %v14, 111
  %v300 = vpop.permute.xlu0 %299
  %301 = vrot.lane.b32.xlu0 %v15, 111
  %v302 = vpop.permute.xlu0 %301
  %303 = vrot.lane.b32.xlu0 %v16, 111
  %v304 = vpop.permute.xlu0 %303
  %305 = vrot.lane.b32.xlu0 %v17, 111
  %v306 = vpop.permute.xlu0 %305
  %vm307 = vcmp.lt.s32.totalorder %v27, 111
  %v308 = vsel %vm307, %v304, %v306
  %v309 = vsel %vm307, %v302, %v304
  %v310 = vsel %vm307, %v300, %v302
  %v311 = vsel %vm307, %v306, %v300
  %s312 = scalar_lea.vmem %s2, 32
  %v313 = vld [vmem:[%s312] ss:$8 sm:$0xf]
  %v315 = vlaneseq
  %v316 = vshrl.u32 %v315, 7
  %v317 = vsub.s32 0, %v316
  %v318 = vrot.slane %v313, %v317
  %v319 = vlaneseq
  %v320 = vshrl.u32 %v319, 7
  %v321 = vsub.s32 1, %v320
  %v322 = vrot.slane %v313, %v321
  %v323 = vlaneseq
  %v324 = vshrl.u32 %v323, 7
  %v325 = vsub.s32 2, %v324
  %v326 = vrot.slane %v313, %v325
  %v327 = vlaneseq
  %v328 = vshrl.u32 %v327, 7
  %v329 = vsub.s32 3, %v328
  %v330 = vrot.slane %v313, %v329
  %v335 = vmul.f32 %v310, %v318
  %v336 = vmul.f32 %v309, %v322
  %v337 = vmul.f32 %v308, %v326
  %v338 = vmul.f32 %v311, %v330
  %v339 = vld [vmem:[%s1] sm:$0xff]
  %vm340 = vcmask 588800
  %v342 = vsel %vm340, %v339, 0
  %344 = vmatprep.subr.mxu0 %v56
  %345 = vmatpush1.msra.mxu0 %v55
  %346 = vmatprep.subr.mxu0 %v96
  %347 = vmatpush1.msra.mxu0 %v95
  %348 = vmatprep.subr.mxu0 %v136
  %349 = vmatpush1.msra.mxu0 %v135
  %350 = vmatprep.subr.mxu0 %v176
  %351 = vmatpush1.msra.mxu0 %v175
  %352 = vmatprep.subr.mxu0 %v15
  %353 = vmatpush1.msra.mxu0 %v14
  %354 = vmatprep.subr.mxu0 %v216
  %355 = vmatpush1.msra.mxu0 %v215
  %356 = vmatprep.subr.mxu0 %v256
  %357 = vmatpush1.msra.mxu0 %v255
  %358 = vmatprep.subr.mxu0 %v296
  %359 = vmatpush1.msra.mxu0 %v295
  %360 = vmatprep.subr.mxu0 %v336
  %361 = vmatpush1.msra.mxu0 %v335
  %362 = vmatprep.subr.mxu0 0.0
  %363 = vmatpush1.msra.mxu0 0.0
  %364 = vmatprep.subr.mxu0 0.0
  %365 = vmatpush1.msra.mxu0 0.0
  %366 = vmatprep.subr.mxu0 0.0
  %367 = vmatpush1.msra.mxu0 0.0
  %368 = vmatprep.subr.mxu0 0.0
  %369 = vmatpush1.msra.mxu0 0.0
  %370 = vmatprep.subr.mxu0 0.0
  %371 = vmatpush1.msra.mxu0 0.0
  %372 = vmatprep.subr.mxu0 0.0
  %373 = vmatpush1.msra.mxu0 0.0
  %374 = vmatprep.subr.mxu0 0.0
  %375 = vmatpush1.msra.mxu0 0.0
  %376 = vmatprep.subr.mxu0 0.0
  %377 = vmatpush1.msra.mxu0 0.0
  %378 = vmatprep.subr.mxu0 0.0
  %379 = vmatpush1.msra.mxu0 0.0
  %380 = vmatprep.subr.mxu0 0.0
  %381 = vmatpush1.msra.mxu0 0.0
  %382 = vmatprep.subr.mxu0 0.0
  %383 = vmatpush1.msra.mxu0 0.0
  %384 = vmatprep.subr.mxu0 0.0
  %385 = vmatpush1.msra.mxu0 0.0
  %386 = vmatprep.subr.mxu0 0.0
  %387 = vmatpush1.msra.mxu0 0.0
  %388 = vmatprep.subr.mxu0 0.0
  %389 = vmatpush1.msra.mxu0 0.0
  %390 = vmatprep.subr.mxu0 0.0
  %391 = vmatpush1.msra.mxu0 0.0
  %392 = vmatprep.subr.mxu0 0.0
  %393 = vmatpush1.msra.mxu0 0.0
  %394 = vmatprep.subr.mxu0 0.0
  %395 = vmatpush1.msra.mxu0 0.0
  %396 = vmatprep.subr.mxu0 0.0
  %397 = vmatpush1.msra.mxu0 0.0
  %398 = vmatprep.subr.mxu0 0.0
  %399 = vmatpush1.msra.mxu0 0.0
  %400 = vmatprep.subr.mxu0 0.0
  %401 = vmatpush1.msra.mxu0 0.0
  %402 = vmatprep.subr.mxu0 0.0
  %403 = vmatpush1.msra.mxu0 0.0
  %404 = vmatprep.subr.mxu0 0.0
  %405 = vmatpush1.msra.mxu0 0.0
  %406 = vmatprep.subr.mxu0 0.0
  %407 = vmatpush1.msra.mxu0 0.0
  %408 = vmatprep.mubr.f32.mxu0 0.0
  %409 = vmatmul.mubr.f32.gmra.mrb[0].mxu0 %v342
  %v410 = vpop.f32.mrb[0].mxu0
  %v411 = vadd.f32 0.0, %v410
  %v412 = vpop.f32.mrb[0].mxu0
  %v413 = vadd.f32 0.0, %v412
  %414 = vdwg.mxu0
  %415 = vmatprep.subr.mxu0 %v58
  %416 = vmatpush1.msra.mxu0 %v57
  %417 = vmatprep.subr.mxu0 %v98
  %418 = vmatpush1.msra.mxu0 %v97
  %419 = vmatprep.subr.mxu0 %v138
  %420 = vmatpush1.msra.mxu0 %v137
  %421 = vmatprep.subr.mxu0 %v178
  %422 = vmatpush1.msra.mxu0 %v177
  %423 = vmatprep.subr.mxu0 %v17
  %424 = vmatpush1.msra.mxu0 %v16
  %425 = vmatprep.subr.mxu0 %v218
  %426 = vmatpush1.msra.mxu0 %v217
  %427 = vmatprep.subr.mxu0 %v258
  %428 = vmatpush1.msra.mxu0 %v257
  %429 = vmatprep.subr.mxu0 %v298
  %430 = vmatpush1.msra.mxu0 %v297
  %431 = vmatprep.subr.mxu0 %v338
  %432 = vmatpush1.msra.mxu0 %v337
  %433 = vmatprep.subr.mxu0 0.0
  %434 = vmatpush1.msra.mxu0 0.0
  %435 = vmatprep.subr.mxu0 0.0
  %436 = vmatpush1.msra.mxu0 0.0
  %437 = vmatprep.subr.mxu0 0.0
  %438 = vmatpush1.msra.mxu0 0.0
  %439 = vmatprep.subr.mxu0 0.0
  %440 = vmatpush1.msra.mxu0 0.0
  %441 = vmatprep.subr.mxu0 0.0
  %442 = vmatpush1.msra.mxu0 0.0
  %443 = vmatprep.subr.mxu0 0.0
  %444 = vmatpush1.msra.mxu0 0.0
  %445 = vmatprep.subr.mxu0 0.0
  %446 = vmatpush1.msra.mxu0 0.0
  %447 = vmatprep.subr.mxu0 0.0
  %448 = vmatpush1.msra.mxu0 0.0
  %449 = vmatprep.subr.mxu0 0.0
  %450 = vmatpush1.msra.mxu0 0.0
  %451 = vmatprep.subr.mxu0 0.0
  %452 = vmatpush1.msra.mxu0 0.0
  %453 = vmatprep.subr.mxu0 0.0
  %454 = vmatpush1.msra.mxu0 0.0
  %455 = vmatprep.subr.mxu0 0.0
  %456 = vmatpush1.msra.mxu0 0.0
  %457 = vmatprep.subr.mxu0 0.0
  %458 = vmatpush1.msra.mxu0 0.0
  %459 = vmatprep.subr.mxu0 0.0
  %460 = vmatpush1.msra.mxu0 0.0
  %461 = vmatprep.subr.mxu0 0.0
  %462 = vmatpush1.msra.mxu0 0.0
  %463 = vmatprep.subr.mxu0 0.0
  %464 = vmatpush1.msra.mxu0 0.0
  %465 = vmatprep.subr.mxu0 0.0
  %466 = vmatpush1.msra.mxu0 0.0
  %467 = vmatprep.subr.mxu0 0.0
  %468 = vmatpush1.msra.mxu0 0.0
  %469 = vmatprep.subr.mxu0 0.0
  %470 = vmatpush1.msra.mxu0 0.0
  %471 = vmatprep.subr.mxu0 0.0
  %472 = vmatpush1.msra.mxu0 0.0
  %473 = vmatprep.subr.mxu0 0.0
  %474 = vmatpush1.msra.mxu0 0.0
  %475 = vmatprep.subr.mxu0 0.0
  %476 = vmatpush1.msra.mxu0 0.0
  %477 = vmatprep.subr.mxu0 0.0
  %478 = vmatpush1.msra.mxu0 0.0
  %479 = vmatprep.mubr.f32.mxu0 0.0
  %480 = vmatmul.mubr.f32.gmra.mrb[0].mxu0 %v342
  %v481 = vpop.f32.mrb[0].mxu0
  %v482 = vadd.f32 0.0, %v481
  %v483 = vpop.f32.mrb[0].mxu0
  %v484 = vadd.f32 0.0, %v483
  %485 = vdwg.mxu0
  %486 = vst [vmem:[%s3] sm:$0xff] %v411
  %487 = vst [vmem:[%s3 + $0x8] sm:$0xff] %v413
  %s488 = scalar_lea.vmem %s3, 16
  %489 = vst [vmem:[%s488] sm:$0xff] %v482
  %490 = vst [vmem:[%s488 + $0x8] sm:$0xff] %v484
  // Predicated region
  $region14: #{key_generator_forward.1} parent=0 // pred_check
    _
  $region15: #{key_generator_forward.1} parent=0 // pred_check_branch
    %492 = sbr.rel (0) target = $region17
  $region16: #{key_generator_forward.1} parent=0 // pred_region
    _
  $region17: #{key_generator_forward.1} parent=0 // pred_fallthru
    _
  // Predicated region
  $region18: #{key_generator_forward.1} parent=0 // pred_check
    _
  $region19: #{key_generator_forward.1} parent=0 // pred_check_branch
    %494 = sbr.rel (0) target = $region21
  $region20: #{key_generator_forward.1} parent=0 // pred_region
    _
  $region21: #{key_generator_forward.1} parent=0 // pred_fallthru
    _

</llo_original>
